<compile_context>
chip_gen: v5e
topology: v5e:2x2
jax: 0.10.0
libtpu: 0.0.40
codegen_flags: <defaults>
</compile_context>

<pallas_src>
import functools

import jax
import jax.numpy as jnp
from jax.experimental import pallas as pl
from jax.experimental.pallas import tpu as pltpu

_MIB = 1024 * 1024


def _channel_attention_kernel(x_ref, w1_ref, w2_ref, o_ref, *, inv_hw):
    # x_ref / o_ref block: (TB, C, HW) in the input's native dtype.
    # w1: (Cr, C); w2: (C, Cr) — the two 1x1 convs (no bias), pre-cast to f32 in the wrapper.

    # Global average pool over spatial (AdaptiveAvgPool2d(1)).  The f32 cast streams
    # through the reduction; no persistent f32 copy of the big tile is materialized.
    pooled = jnp.sum(x_ref[...].astype(jnp.float32), axis=-1) * inv_hw       # (TB, C) f32

    # fc1 (1x1 conv) + ReLU:  (TB, C) x (Cr, C)^T -> (TB, Cr)
    h = jnp.einsum("bc,rc->br", pooled, w1_ref[...],
                   preferred_element_type=jnp.float32)
    h = jnp.maximum(h, 0.0)
    # fc2 (1x1 conv) + sigmoid:  (TB, Cr) x (C, Cr)^T -> (TB, C)
    gate = jax.nn.sigmoid(jnp.einsum("br,cr->bc", h, w2_ref[...],
                                     preferred_element_type=jnp.float32))    # (TB, C) f32

    # Channel-wise scale broadcast over spatial.  Re-read the tile (don't keep one SSA
    # value live across the gate chain); keep the big multiply in the input's native
    # width — only the tiny (TB, C) gate is cast.
    o_ref[...] = x_ref[...] * gate.astype(o_ref.dtype)[:, :, None]


def _vmem_capacity_bytes():
    try:
        return int(pltpu.get_tpu_info().vmem_capacity_bytes)
    except Exception:
        return 64 * _MIB  # conservative (v7x-sized) fallback


def channel_attention2(x_nchw, w1, w2):
    """x_nchw: (B, C, H, W); w1: (C//r, C); w2: (C, C//r).  Returns (B, C, H, W)."""
    B, C, H, W = x_nchw.shape
    Cr = w1.shape[0]
    HW = H * W
    dtype_bytes = jnp.dtype(x_nchw.dtype).itemsize

    # No padding: last block dim equals the full HW, so there are no extra pad/slice HBM
    # passes and no inflated in-kernel traffic (just a masked tail vst if HW % 128 != 0).
    x_flat = x_nchw.reshape(B, C, HW)

    # Hoist the tiny 1x1-conv weight casts out of the kernel (once, not per grid step).
    w1 = w1.astype(jnp.float32)
    w2 = w2.astype(jnp.float32)
    weight_bytes = (w1.size + w2.size) * 4

    # --- VMEM budget (generation-aware) ------------------------------------------------
    vmem_cap = _vmem_capacity_bytes()
    headroom = 16 * _MIB                       # Mosaic internal scratch + gate temporaries
    usable = max(vmem_cap - headroom, 8 * _MIB)
    per_buffer_budget = min(usable // 4, 16 * _MIB)   # 2 in + 2 out buffers of the big tile

    bytes_per_batch = C * HW * dtype_bytes

    # --- pick TB (batch rows per grid step) ---------------------------------------------
    # Cap TB so the grid has >= min(B, 4) steps: keeps the software pipeline overlapped and
    # lets v7x shard the 'parallel' axis over both TensorCores.
    min_steps = min(B, 4)
    tb_cap = max(1, B // min_steps)
    tb = 1
    for cand in range(tb_cap, 0, -1):
        if B % cand == 0 and cand * bytes_per_batch <= per_buffer_budget:
            tb = cand
            break

    block_bytes = tb * bytes_per_batch
    if block_bytes > per_buffer_budget:
        # Even a single-batch block exceeds the per-buffer budget; proceed only if the
        # whole pipeline still fits physical VMEM, otherwise fail loudly.
        if 4 * block_bytes + 2 * weight_bytes + 2 * _MIB > usable:
            # TODO(synk): two-phase HW-tiled fallback (pool-accumulate over an 'arbitrary'
            # HW grid axis, then an HW-tiled scale pass) for huge C*HW.
            raise ValueError(
                f"ChannelAttention2: a single (1, {C}, {HW}) block "
                f"({block_bytes / _MIB:.1f} MiB) does not fit the VMEM budget "
                f"({usable / _MIB:.1f} MiB usable of {vmem_cap / _MIB:.1f} MiB).")

    grid_steps = B // tb

    # Optional 3-deep input buffering when steps are short and the grid is long (v7x).
    x_spec_kwargs = {}
    in_buffers = 2
    if (grid_steps >= 4 and block_bytes <= 4 * _MIB
            and 5 * block_bytes + 2 * weight_bytes + 2 * _MIB <= usable):
        x_spec_kwargs["pipeline_mode"] = pl.Buffered(3)
        in_buffers = 3

    vmem_needed = (in_buffers + 2) * block_bytes + 2 * weight_bytes + 2 * _MIB
    vmem_limit = int(min(max(vmem_needed, 32 * _MIB), vmem_cap))

    cost = pl.CostEstimate(
        flops=2 * B * C * HW + 4 * B * C * Cr,          # pool + scale + two tiny matmuls
        transcendentals=B * C,                          # sigmoid
        bytes_accessed=2 * B * C * HW * dtype_bytes + weight_bytes,
    )

    kernel = functools.partial(_channel_attention_kernel, inv_hw=1.0 / HW)

    out_flat = pl.pallas_call(
        kernel,
        out_shape=jax.ShapeDtypeStruct((B, C, HW), x_nchw.dtype),
        grid_spec=pltpu.PrefetchScalarGridSpec(
            num_scalar_prefetch=0,
            grid=(grid_steps,),
            in_specs=[
                pl.BlockSpec((tb, C, HW), lambda b: (b, 0, 0), **x_spec_kwargs),
                pl.BlockSpec((Cr, C), lambda b: (0, 0)),
                pl.BlockSpec((C, Cr), lambda b: (0, 0)),
            ],
            out_specs=pl.BlockSpec((tb, C, HW), lambda b: (b, 0, 0)),
        ),
        compiler_params=pltpu.CompilerParams(
            dimension_semantics=("parallel",),
            vmem_limit_bytes=vmem_limit,
        ),
        cost_estimate=cost,
    )(x_flat, w1, w2)

    return out_flat.reshape(B, C, H, W)


def _reference(x, w1, w2):
    # Pure-JAX reference matching the PyTorch forward.
    pooled = jnp.mean(x.astype(jnp.float32), axis=(2, 3))         # (B, C)
    h = jax.nn.relu(pooled @ w1.astype(jnp.float32).T)            # (B, Cr)
    y = jax.nn.sigmoid(h @ w2.astype(jnp.float32).T)              # (B, C)
    return x * y.astype(x.dtype)[:, :, None, None]


if __name__ == "__main__":
    key = jax.random.PRNGKey(0)
    reduction_ratio = 4

    # One 128-multiple spatial size and one typical non-multiple SE shape (14*14 = 196)
    # to exercise the unpadded, full-HW-block path.
    for (B, C, H, W) in [(2, 8, 16, 16), (2, 8, 14, 14)]:
        Cr = max(1, C // reduction_ratio)
        kx, k1, k2, key = jax.random.split(key, 4)
        x = jax.random.normal(kx, (B, C, H, W), dtype=jnp.float32)
        # Deterministic "kaiming-ish" init for the two 1x1 conv weights (no bias).
        w1 = jax.random.normal(k1, (Cr, C), dtype=jnp.float32) * (1.0 / (C ** 0.5))
        w2 = jax.random.normal(k2, (C, Cr), dtype=jnp.float32) * (1.0 / (Cr ** 0.5))

        out = jax.block_until_ready(channel_attention2(x, w1, w2))
        ref = _reference(x, w1, w2)
        assert jnp.allclose(out, ref, atol=1e-5, rtol=1e-5), f"mismatch at {(B, C, H, W)}"

    print("KERNEL_OK")
</pallas_src>

<mosaic_0001>
module attributes {stable_mosaic.version = 11 : i64} {
  func.func @_channel_attention_kernel(%arg0: i32, %arg1: memref<1x8x256xf32, #tpu.memory_space<vmem>>, %arg2: memref<2x8xf32, #tpu.memory_space<vmem>>, %arg3: memref<8x2xf32, #tpu.memory_space<vmem>>, %arg4: memref<1x8x256xf32, #tpu.memory_space<vmem>>) attributes {dimension_semantics = [#tpu.dimension_semantics<parallel>], iteration_bounds = array<i64: 2>, scalar_prefetch = 0 : i64, scratch_operands = 0 : i64, tpu.core_type = #tpu.core_type<tc>, window_params = [{transform_indices = @transform_0, window_bounds = array<i64: 1, 8, 256>}, {pipeline_mode = #tpu.pipeline_mode<synchronous>, transform_indices = @transform_1, window_bounds = array<i64: 2, 8>}, {pipeline_mode = #tpu.pipeline_mode<synchronous>, transform_indices = @transform_2, window_bounds = array<i64: 8, 2>}, {transform_indices = @transform_3, window_bounds = array<i64: 1, 8, 256>}]} {
    %c0 = arith.constant 0 : index
    %c0_0 = arith.constant 0 : index
    %c0_1 = arith.constant 0 : index
    %0 = vector.load %arg1[%c0, %c0_0, %c0_1] : memref<1x8x256xf32, #tpu.memory_space<vmem>>, vector<1x8x256xf32>
    %cst = arith.constant dense<0.000000e+00> : vector<1x8xf32>
    %1 = vector.multi_reduction <add>, %0, %cst [2] : vector<1x8x256xf32> to vector<1x8xf32>
    %cst_2 = arith.constant 3.906250e-03 : f32
    %2 = vector.broadcast %cst_2 : f32 to vector<1x8xf32>
    %3 = arith.mulf %1, %2 : vector<1x8xf32>
    %c0_3 = arith.constant 0 : index
    %c0_4 = arith.constant 0 : index
    %4 = vector.load %arg2[%c0_3, %c0_4] : memref<2x8xf32, #tpu.memory_space<vmem>>, vector<2x8xf32>
    "tpu.trace_start"() <{level = 10 : i32, message = "bc,rc->br"}> : () -> ()
    %cst_5 = arith.constant dense<0.000000e+00> : vector<1x2xf32>
    %5 = tpu.matmul %3, %4, %cst_5 {dimension_numbers = #tpu.dot_dimension_numbers<[1], [1], [0], [0], [0, 0, 1, 0], [], []>} : vector<1x8xf32>, vector<2x8xf32>, vector<1x2xf32> -> vector<1x2xf32>
    "tpu.trace_stop"() : () -> ()
    %cst_6 = arith.constant 0.000000e+00 : f32
    %6 = vector.broadcast %cst_6 : f32 to vector<1x2xf32>
    %7 = arith.maximumf %5, %6 : vector<1x2xf32>
    %c0_7 = arith.constant 0 : index
    %c0_8 = arith.constant 0 : index
    %8 = vector.load %arg3[%c0_7, %c0_8] : memref<8x2xf32, #tpu.memory_space<vmem>>, vector<8x2xf32>
    "tpu.trace_start"() <{level = 10 : i32, message = "br,cr->bc"}> : () -> ()
    %cst_9 = arith.constant dense<0.000000e+00> : vector<1x8xf32>
    %9 = tpu.matmul %7, %8, %cst_9 {dimension_numbers = #tpu.dot_dimension_numbers<[1], [1], [0], [0], [0, 0, 1, 0], [], []>} : vector<1x2xf32>, vector<8x2xf32>, vector<1x8xf32> -> vector<1x8xf32>
    "tpu.trace_stop"() : () -> ()
    %10 = arith.negf %9 : vector<1x8xf32>
    %11 = math.exp %10 : vector<1x8xf32>
    %cst_10 = arith.constant 1.000000e+00 : f32
    %12 = vector.broadcast %cst_10 : f32 to vector<1x8xf32>
    %13 = arith.addf %12, %11 : vector<1x8xf32>
    %14 = arith.divf %12, %13 : vector<1x8xf32>
    %c0_11 = arith.constant 0 : index
    %c0_12 = arith.constant 0 : index
    %c0_13 = arith.constant 0 : index
    %15 = vector.load %arg1[%c0_11, %c0_12, %c0_13] : memref<1x8x256xf32, #tpu.memory_space<vmem>>, vector<1x8x256xf32>
    %16 = vector.shape_cast %14 : vector<1x8xf32> to vector<1x8x1xf32>
    %17 = vector.broadcast %16 : vector<1x8x1xf32> to vector<1x8x256xf32>
    %18 = arith.mulf %15, %17 : vector<1x8x256xf32>
    %c0_14 = arith.constant 0 : index
    %c0_15 = arith.constant 0 : index
    %c0_16 = arith.constant 0 : index
    %19 = vector.load %arg4[%c0_14, %c0_15, %c0_16] : memref<1x8x256xf32, #tpu.memory_space<vmem>>, vector<1x8x256xf32>
    tpu.vector_store %arg4[%c0_14, %c0_15, %c0_16], %18 {strides = array<i32>} : memref<1x8x256xf32, #tpu.memory_space<vmem>>, vector<1x8x256xf32>,
    return
  }
  func.func @transform_0(%arg0: i32) -> (i32, i32, i32) {
    %c0_i32 = arith.constant 0 : i32
    %c0_i32_0 = arith.constant 0 : i32
    %c0_i32_1 = arith.constant 0 : i32
    return %arg0, %c0_i32, %c0_i32_0 : i32, i32, i32
  }
  func.func @transform_1(%arg0: i32) -> (i32, i32) {
    %c0_i32 = arith.constant 0 : i32
    %c0_i32_0 = arith.constant 0 : i32
    %c0_i32_1 = arith.constant 0 : i32
    return %c0_i32, %c0_i32_0 : i32, i32
  }
  func.func @transform_2(%arg0: i32) -> (i32, i32) {
    %c0_i32 = arith.constant 0 : i32
    %c0_i32_0 = arith.constant 0 : i32
    %c0_i32_1 = arith.constant 0 : i32
    return %c0_i32, %c0_i32_0 : i32, i32
  }
  func.func @transform_3(%arg0: i32) -> (i32, i32, i32) {
    %c0_i32 = arith.constant 0 : i32
    %c0_i32_0 = arith.constant 0 : i32
    %c0_i32_1 = arith.constant 0 : i32
    return %arg0, %c0_i32, %c0_i32_0 : i32, i32, i32
  }
}

</mosaic_0001>

<llo_original>
// kernel: tpu_custom_call.1
$region0: #{tpu_custom_call.1}
  #allocation0 [shape = 'u32[]', space=smem, size = 0x4, offset = 0x4, fixed_abs, tag = 'smem constant byte address 0x4 - core index']
  #allocation1 [shape = 'u32[72,128]{1,0:T(1,128)}', space=vmem, size = 0x9000, scoped, tag = 'internal scratch']
  %s0 = inlined_call_operand.hbm [shape: f32[2,8,256], index: 0, kind: input, shape index: {}]
  %s1 = inlined_call_operand.vmem [shape: f32[2,8], index: 1, kind: input, shape index: {}]
  %s2 = inlined_call_operand.vmem [shape: f32[8,2], index: 2, kind: input, shape index: {}]
  %s3 = inlined_call_operand.hbm [shape: f32[2,8,256], index: 3, kind: output, shape index: {}]
  %s4 = sld [smem:[#allocation0]]
  $region49: #{tpu_custom_call.1} parent=0
    _
  %s6 = ssub.s32 1, %s4
  %s7 = scalar_select 0, %s6, %s4
  $region1: #{tpu_custom_call.1} parent=0
    #allocation2 [shape = 'u8[16384]{0}', space=vmem, size = 0x4000, scoped, tag = 'input window, operand 0']
    #allocation3 [shape = 's32[2]{0}', space=sflag, size = 0x8, scoped, tag = 'scoped memory for tpu_custom_call.1']
    #allocation4 [shape = 's32[2]{0}', space=sflag, size = 0x8, scoped, tag = 'scoped memory for tpu_custom_call.1']
    #allocation5 [shape = 'u8[16384]{0}', space=vmem, size = 0x4000, scoped, tag = 'output window, operand 0']
    %8 = vsyncpa [#allocation3], 0
    %s9 = scalar_lea.sflag [#allocation3], 1
    %10 = vsyncpa %s9, 0
    %11 = vsyncpa [#allocation4], 0
    %s12 = scalar_lea.sflag [#allocation4], 1
    %13 = vsyncpa %s12, 0
    loop: start=0, step=1, limit=4
    $region2: #{tpu_custom_call.1} parent=1 // loop_pre_header
      _
    $region3: #{tpu_custom_call.1} parent=1 // loop_header
      %s15 = sphi 0, %s19
      %p16 = scmp.ge.s32.totalorder %s15, 4
      %s25 = sphi 0, %s27
      %s28 = sphi 0, %s25
      %s29 = sphi 0, %s28
      %s45 = sphi 0, %s29
      %s49 = sphi 0, %s49
      %s51 = sphi 0, %s49
      %s52 = sphi 0, %s51
      %s66 = sphi 0, %s52
      %s70 = sphi 0, %s70
      %s72 = sphi 0, %s70
      %s73 = sphi 0, %s72
      %s87 = sphi 0, %s73
      %s93 = sphi 0, %s95
      %s96 = sphi 0, %s93
      %s97 = sphi 0, %s96
      %s113 = sphi 0, %s97
    $region4: #{tpu_custom_call.1} parent=1 // loop_header_branch
      %18 = sbr.rel (%p16) target = $region8
    $region5: #{tpu_custom_call.1} parent=1 // loop_body
      %s20 = ssub.s32 %s15, 1
      %s21 = ssub.s32 %s15, 2
      %s22 = sadd.s32 %s15, 1
      %s23 = ssub.s32 %s15, %s22
      %p24 = scmp.eq.s32.totalorder %s23, 0
      %s26 = sadd.s32 %s25, 1
      %s27 = scalar_select %p24, %s25, %s26
      %p30 = pneg %p24
      %p31 = scmp.eq.s32.totalorder %s15, 1
      %p32 = por %p30, %p31
      %p33 = scmp.ne.s32.totalorder %s25, %s28
      %p34 = scmp.eq.s32.totalorder %s15, 0
      %p35 = por %p33, %p34
      %p36 = scmp.ne.s32.totalorder %s25, %s28
      %p37 = scmp.eq.s32.totalorder %s20, 1
      %p38 = por %p36, %p37
      %p39 = scmp.ne.s32.totalorder %s28, %s29
      %p40 = scmp.eq.s32.totalorder %s20, 0
      %p41 = por %p39, %p40
      %p42 = scmp.ne.s32.totalorder %s28, %s29
      %p43 = scmp.eq.s32.totalorder %s21, 1
      %p44 = por %p42, %p43
      %p46 = scmp.ne.s32.totalorder %s29, %s45
      %p47 = scmp.eq.s32.totalorder %s21, 0
      %p48 = por %p46, %p47
      %s50 = sadd.s32 %s49, 1
      %p53 = scmp.eq.s32.totalorder %s15, 1
      %p54 = scmp.ne.s32.totalorder %s49, %s51
      %p55 = scmp.eq.s32.totalorder %s15, 0
      %p56 = por %p54, %p55
      %p57 = scmp.ne.s32.totalorder %s49, %s51
      %p58 = scmp.eq.s32.totalorder %s20, 1
      %p59 = por %p57, %p58
      %p60 = scmp.ne.s32.totalorder %s51, %s52
      %p61 = scmp.eq.s32.totalorder %s20, 0
      %p62 = por %p60, %p61
      %p63 = scmp.ne.s32.totalorder %s51, %s52
      %p64 = scmp.eq.s32.totalorder %s21, 1
      %p65 = por %p63, %p64
      %p67 = scmp.ne.s32.totalorder %s52, %s66
      %p68 = scmp.eq.s32.totalorder %s21, 0
      %p69 = por %p67, %p68
      %s71 = sadd.s32 %s70, 1
      %p74 = scmp.eq.s32.totalorder %s15, 1
      %p75 = scmp.ne.s32.totalorder %s70, %s72
      %p76 = scmp.eq.s32.totalorder %s15, 0
      %p77 = por %p75, %p76
      %p78 = scmp.ne.s32.totalorder %s70, %s72
      %p79 = scmp.eq.s32.totalorder %s20, 1
      %p80 = por %p78, %p79
      %p81 = scmp.ne.s32.totalorder %s72, %s73
      %p82 = scmp.eq.s32.totalorder %s20, 0
      %p83 = por %p81, %p82
      %p84 = scmp.ne.s32.totalorder %s72, %s73
      %p85 = scmp.eq.s32.totalorder %s21, 1
      %p86 = por %p84, %p85
      %p88 = scmp.ne.s32.totalorder %s73, %s87
      %p89 = scmp.eq.s32.totalorder %s21, 0
      %p90 = por %p88, %p89
      %s91 = ssub.s32 %s15, %s22
      %p92 = scmp.eq.s32.totalorder %s91, 0
      %s94 = sadd.s32 %s93, 1
      %s95 = scalar_select %p92, %s93, %s94
      %p98 = pneg %p92
      %p99 = scmp.eq.s32.totalorder %s15, 1
      %p100 = por %p98, %p99
      %p101 = scmp.ne.s32.totalorder %s93, %s96
      %p102 = scmp.eq.s32.totalorder %s15, 0
      %p103 = por %p101, %p102
      %p104 = scmp.ne.s32.totalorder %s93, %s96
      %p105 = scmp.eq.s32.totalorder %s20, 1
      %p106 = por %p104, %p105
      %p107 = scmp.ne.s32.totalorder %s96, %s97
      %p108 = scmp.eq.s32.totalorder %s20, 0
      %p109 = por %p107, %p108
      %p110 = scmp.ne.s32.totalorder %s96, %s97
      %p111 = scmp.eq.s32.totalorder %s21, 1
      %p112 = por %p110, %p111
      %p114 = scmp.ne.s32.totalorder %s97, %s113
      %p115 = scmp.eq.s32.totalorder %s21, 0
      %p116 = por %p114, %p115
      %p117 = scmp.le.s32.totalorder 1, %s15
      %p118 = scmp.lt.s32.totalorder %s15, 3
      %p119 = pnand %p117, %p118
      %p120 = pneg %p119
      // Predicated region
      $region9: #{tpu_custom_call.1} parent=5 // pred_check
        _
      $region10: #{tpu_custom_call.1} parent=5 // pred_check_branch
        %122 = sbr.rel (%p119) target = $region12
      $region11: #{tpu_custom_call.1} parent=5 // pred_region
        %s123 = ssub.s32 %s15, 1
        // Predicated region
        $region13: #{tpu_custom_call.1} parent=11 // pred_check
          %p124 = pneg %p62
        $region14: #{tpu_custom_call.1} parent=11 // pred_check_branch
          %126 = sbr.rel (%p124) target = $region16
        $region15: #{tpu_custom_call.1} parent=11 // pred_region
          _
        $region16: #{tpu_custom_call.1} parent=11 // pred_fallthru
          _
        // Predicated region
        $region17: #{tpu_custom_call.1} parent=11 // pred_check
          %p127 = pneg %p83
        $region18: #{tpu_custom_call.1} parent=11 // pred_check_branch
          %129 = sbr.rel (%p127) target = $region20
        $region19: #{tpu_custom_call.1} parent=11 // pred_region
          _
        $region20: #{tpu_custom_call.1} parent=11 // pred_fallthru
          _
      $region12: #{tpu_custom_call.1} parent=5 // pred_fallthru
        _
      %p130 = scmp.lt.s32.totalorder %s15, 2
      // Predicated region
      $region21: #{tpu_custom_call.1} parent=5 // pred_check
        %p131 = pneg %p130
      $region22: #{tpu_custom_call.1} parent=5 // pred_check_branch
        %133 = sbr.rel (%p131) target = $region24
      $region23: #{tpu_custom_call.1} parent=5 // pred_region
        // Predicated region
        $region25: #{tpu_custom_call.1} parent=23 // pred_check
          %p134 = pneg %p35
        $region26: #{tpu_custom_call.1} parent=23 // pred_check_branch
          %136 = sbr.rel (%p134) target = $region28
        $region27: #{tpu_custom_call.1} parent=23 // pred_region
          %s137 = sand.u32 %s25, 1
          %s138 = scalar_lea.sflag [#allocation3], %s137
          %s139 = sand.u32 %s25, 1
          %s140 = smul.addr %s139, 16
          %s141 = scalar_lea.vmem [#allocation2], %s140
          %143 = vsyncadd %s138, 0
          %s144 = smul.addr %s15, 2
          %s145 = smul.addr %s144, 8
          %s146 = scalar_lea.hbm %s0, %s145
          %s148 = sshll.u32 %s146, 4
          %s149 = int_to_ptr.hbm [resolvable:$true] %s148
          %s150 = sshll.u32 %s141, 4
          %s151 = int_to_ptr.vmem [resolvable:$true] %s150
          %153 = dma.hbm_to_vmem [thread:$0]  %s149, 256, %s151, %s138
        $region28: #{tpu_custom_call.1} parent=23 // pred_fallthru
          _
      $region24: #{tpu_custom_call.1} parent=5 // pred_fallthru
        _
      %p154 = scmp.le.s32.totalorder 1, %s15
      %p155 = scmp.lt.s32.totalorder %s15, 3
      %p156 = pnand %p154, %p155
      %p157 = pneg %p156
      // Predicated region
      $region29: #{tpu_custom_call.1} parent=5 // pred_check
        _
      $region30: #{tpu_custom_call.1} parent=5 // pred_check_branch
        %159 = sbr.rel (%p156) target = $region32
      $region31: #{tpu_custom_call.1} parent=5 // pred_region
        %s160 = ssub.s32 %s15, 1
        %s161 = sand.u32 %s28, 1
        %s162 = scalar_lea.sflag [#allocation3], %s161
        %s163 = sand.u32 %s28, 1
        %s164 = smul.addr %s163, 16
        %s165 = scalar_lea.vmem [#allocation2], %s164
        // Predicated region
        $region33: #{tpu_custom_call.1} parent=31 // pred_check
          %p166 = pneg %p41
        $region34: #{tpu_custom_call.1} parent=31 // pred_check_branch
          %168 = sbr.rel (%p166) target = $region36
        $region35: #{tpu_custom_call.1} parent=31 // pred_region
          %170 = dma.done %s162, 256
        $region36: #{tpu_custom_call.1} parent=31 // pred_fallthru
          _
        %s171 = sand.u32 %s28, 1
        %s172 = scalar_lea.sflag [#allocation3], %s171
        %s173 = sand.u32 %s28, 1
        %s174 = smul.addr %s173, 16
        %s175 = scalar_lea.vmem [#allocation2], %s174
        %p176 = pneg %p41
        %p177 = pneg %p38
        %p178 = pneg %p62
        %p179 = pneg %p59
        %p180 = pneg %p83
        %p181 = pneg %p80
        %p182 = pneg %p109
        %p183 = pneg %p106
        %s184 = sand.u32 %s96, 1
        %s185 = scalar_lea.sflag [#allocation4], %s184
        %s186 = sand.u32 %s96, 1
        %s187 = smul.addr %s186, 16
        %s188 = scalar_lea.vmem [#allocation5], %s187
        %v189 = vld [vmem:[%s165] sm:$0xff]
        %v190 = vld [vmem:[%s165 + $0x8] sm:$0xff]
        %v191 = vadd.f32 %v189, %v190
        %192 = vadd.xlane.f32.xlu0 %v191
        %v193 = vpop.xlane.xlu0 %192
        %v194 = vmul.f32 %v193, 0.00390625
        %v195 = vld [vmem:[%s1] sm:$0x3]
        %v197 = vlaneseq
        %v198 = vand.u32 %v197, 127
        %v199 = vperm.slane %v194, %v198
        %vm200 = vcmask 64512
        %v201 = vsel %vm200, %v199, 0
        %v204 = vsel %vm200, %v195, 0
        %206 = vmatpush.xpose.msra.mxu0 0.0
        %207 = vmatpush.xpose.msra.mxu0 0.0
        %208 = vmatpush.xpose.msra.mxu0 0.0
        %209 = vmatpush.xpose.msra.mxu0 0.0
        %210 = vmatpush.xpose.msra.mxu0 0.0
        %211 = vmatpush.xpose.msra.mxu0 0.0
        %212 = vmatpush.xpose.msra.mxu0 0.0
        %213 = vmatpush.xpose.msra.mxu0 0.0
        %214 = vmatpush.xpose.msra.mxu0 0.0
        %215 = vmatpush.xpose.msra.mxu0 0.0
        %216 = vmatpush.xpose.msra.mxu0 0.0
        %217 = vmatpush.xpose.msra.mxu0 0.0
        %218 = vmatpush.xpose.msra.mxu0 0.0
        %219 = vmatpush.xpose.msra.mxu0 0.0
        %220 = vmatpush.xpose.msra.mxu0 0.0
        %221 = vmatpush.xpose.msra.mxu0 %v204
        %222 = vmatmul.f32.gmra.mxu0 %v201
        %v223 = vpop.f32.mrf.mxu0
        %v224 = vadd.f32 0.0, %v223
        %225 = vdwg.mxu0
        %v226 = vmax.f32 %v224, 0.0
        %v227 = vld [vmem:[%s2] sm:$0xff]
        %vm228 = vcmask 15360
        %v230 = vsel %vm228, %v226, 0
        %v233 = vsel %vm228, %v227, 0
        %235 = vmatpush.xpose.msra.mxu0 0.0
        %236 = vmatpush.xpose.msra.mxu0 0.0
        %237 = vmatpush.xpose.msra.mxu0 0.0
        %238 = vmatpush.xpose.msra.mxu0 0.0
        %239 = vmatpush.xpose.msra.mxu0 0.0
        %240 = vmatpush.xpose.msra.mxu0 0.0
        %241 = vmatpush.xpose.msra.mxu0 0.0
        %242 = vmatpush.xpose.msra.mxu0 0.0
        %243 = vmatpush.xpose.msra.mxu0 0.0
        %244 = vmatpush.xpose.msra.mxu0 0.0
        %245 = vmatpush.xpose.msra.mxu0 0.0
        %246 = vmatpush.xpose.msra.mxu0 0.0
        %247 = vmatpush.xpose.msra.mxu0 0.0
        %248 = vmatpush.xpose.msra.mxu0 0.0
        %249 = vmatpush.xpose.msra.mxu0 0.0
        %250 = vmatpush.xpose.msra.mxu0 %v233
        %251 = vmatmul.f32.gmra.mxu0 %v230
        %v252 = vpop.f32.mrf.mxu0
        %v253 = vadd.f32 0.0, %v252
        %254 = vdwg.mxu0
        %v255 = vxor.u32 %v253, 2147483648
        %v256 = vmul.f32 %v255, 1.442695
        %v257 = vpow.pop %v256
        %v258 = vadd.f32 %v257, 1.0
        %v259 = vrcp.pop %v258
        %v260 = vmul.f32 %v258, %v259
        %v261 = vsub.f32 1.0, %v260
        %v262 = vmul.f32 %v259, %v261
        %v263 = vadd.f32 %v259, %v262
        %vm264 = vweird.f32 %v258
        %vm265 = vweird.f32 %v259
        %vm266 = vmor %vm264, %vm265
        %v267 = vsel %vm266, %v259, %v263
        %v268 = vand.u32 2147483647, %v258
        %vm269 = vcmp.eq.f32.partialorder %v268, 8.507059e+37
        %v270 = vand.u32 %v258, 2147483648
        %v271 = vor.u32 1.1754944e-38, %v270
        %v272 = vsel %vm269, %v271, %v267
        %v273 = vmul.f32 1.0, %v272
        %v274 = vld [vmem:[%s165] sm:$0xff]
        %v275 = vld [vmem:[%s165 + $0x8] sm:$0xff]
        %v276 = vperm.slane %v273, 0
        %v277 = vlaneseq
        %v278 = vshrl.u32 %v277, 7
        %280 = vset.pattern.permute.xlu0 %v278
        %281 = vperm.xlu0 %280, %v276
        %v282 = vpop.permute.xlu0 %281
        %v283 = vmul.f32 %v274, %v282
        %v284 = vmul.f32 %v275, %v282
        %285 = vst [vmem:[%s188] sm:$0xff] %v283
        %286 = vst [vmem:[%s188 + $0x8] sm:$0xff] %v284
        %s287 = sand.u32 %s96, 1
        %s288 = scalar_lea.sflag [#allocation4], %s287
        %s289 = sand.u32 %s96, 1
        %s290 = smul.addr %s289, 16
        %s291 = scalar_lea.vmem [#allocation5], %s290
        // Predicated region
        $region37: #{tpu_custom_call.1} parent=31 // pred_check
          %p292 = pneg %p106
        $region38: #{tpu_custom_call.1} parent=31 // pred_check_branch
          %294 = sbr.rel (%p292) target = $region40
        $region39: #{tpu_custom_call.1} parent=31 // pred_region
          %296 = vsyncadd %s288, 0
          %s297 = smul.addr %s20, 2
          %s298 = smul.addr %s297, 8
          %s299 = scalar_lea.hbm %s3, %s298
          %s301 = sshll.u32 %s291, 4
          %s302 = int_to_ptr.vmem [resolvable:$true] %s301
          %s303 = sshll.u32 %s299, 4
          %s304 = int_to_ptr.hbm [resolvable:$true] %s303
          %306 = dma.vmem_to_hbm [thread:$0]  %s302, 256, %s304, %s288
        $region40: #{tpu_custom_call.1} parent=31 // pred_fallthru
          _
      $region32: #{tpu_custom_call.1} parent=5 // pred_fallthru
        _
      %p307 = scmp.le.s32.totalorder 2, %s15
      // Predicated region
      $region41: #{tpu_custom_call.1} parent=5 // pred_check
        %p308 = pneg %p307
      $region42: #{tpu_custom_call.1} parent=5 // pred_check_branch
        %310 = sbr.rel (%p308) target = $region44
      $region43: #{tpu_custom_call.1} parent=5 // pred_region
        %s311 = ssub.s32 %s15, 2
        // Predicated region
        $region45: #{tpu_custom_call.1} parent=43 // pred_check
          %p312 = pneg %p112
        $region46: #{tpu_custom_call.1} parent=43 // pred_check_branch
          %314 = sbr.rel (%p312) target = $region48
        $region47: #{tpu_custom_call.1} parent=43 // pred_region
          %s315 = sand.u32 %s97, 1
          %s316 = scalar_lea.sflag [#allocation4], %s315
          %s317 = sand.u32 %s97, 1
          %s318 = smul.addr %s317, 16
          %s319 = scalar_lea.vmem [#allocation5], %s318
          %321 = dma.done %s316, 256
        $region48: #{tpu_custom_call.1} parent=43 // pred_fallthru
          _
      $region44: #{tpu_custom_call.1} parent=5 // pred_fallthru
        _
    $region6: #{tpu_custom_call.1} parent=1 // loop_footer
      %s19 = sadd.s32 1, %s15
    $region7: #{tpu_custom_call.1} parent=1 // loop_footer_branch
      %14 = sbr.rel target = $region3
    $region8: #{tpu_custom_call.1} parent=1 // loop_exit
      _
    %322 = vsyncpa [#allocation3], 1
    %s323 = scalar_lea.sflag [#allocation3], 1
    %324 = vsyncpa %s323, 1
    %325 = vsyncpa [#allocation4], 1
    %s326 = scalar_lea.sflag [#allocation4], 1
    %327 = vsyncpa %s326, 1

</llo_original>
